<compile_context>
chip_gen: v7x
topology: tpu7x:2x2x1
jax: 0.10.0
libtpu: 0.0.40
codegen_flags: <defaults>
</compile_context>

<pallas_src>
import jax
import jax.numpy as jnp
from jax.experimental import pallas as pl
from jax.experimental.pallas import tpu as pltpu


def _sigmoid_kernel(x_ref, o_ref):
    # Exact elementwise sigmoid on the whole (tiny) tile.
    # Single EUP push (tanh) + two cheap VPU ops per vreg.
    x = x_ref[...].astype(jnp.float32)
    y = 0.5 * jnp.tanh(0.5 * x) + 0.5
    o_ref[...] = y.astype(o_ref.dtype)


def sigmoid_pallas(x):
    """Applies sigmoid to an NCHW tensor via a minimal Pallas TPU kernel."""
    orig_shape = x.shape
    # Pure metadata reshape to a 2-D lane-major view; no pad, no extra copies.
    x2d = x.reshape(orig_shape[0], -1)

    out2d = pl.pallas_call(
        _sigmoid_kernel,
        out_shape=jax.ShapeDtypeStruct(x2d.shape, x2d.dtype),
        in_specs=[pl.BlockSpec(memory_space=pltpu.MemorySpace.VMEM)],
        out_specs=pl.BlockSpec(memory_space=pltpu.MemorySpace.VMEM),
        input_output_aliases={0: 0},
    )(x2d)

    return out2d.reshape(orig_shape)


if __name__ == "__main__":
    key = jax.random.PRNGKey(0)
    # Matches the module's expected input shape [1, 288, 1, 1].
    x93 = jax.random.normal(key, (1, 288, 1, 1), dtype=jnp.float32)

    x94 = sigmoid_pallas(x93)
    jax.block_until_ready(x94)

    # Sanity check against the pure-JAX reference (exact formulation -> tight tol).
    ref = jax.nn.sigmoid(x93)
    assert x94.shape == (1, 288, 1, 1)
    assert jnp.allclose(x94, ref, atol=1e-6, rtol=1e-6)

    print("KERNEL_OK")
</pallas_src>

<mosaic_0001>
module attributes {stable_mosaic.version = 11 : i64} {
  func.func @_sigmoid_kernel(%arg0: memref<1x288xf32, #tpu.memory_space<vmem>>, %arg1: memref<1x288xf32, #tpu.memory_space<vmem>>) attributes {dimension_semantics = [], scalar_prefetch = 0 : i64, scratch_operands = 0 : i64, tpu.core_type = #tpu.core_type<tc>} {
    %c0 = arith.constant 0 : index
    %c0_0 = arith.constant 0 : index
    %0 = vector.load %arg0[%c0, %c0_0] : memref<1x288xf32, #tpu.memory_space<vmem>>, vector<1x288xf32>
    %cst = arith.constant 5.000000e-01 : f32
    %1 = vector.broadcast %cst : f32 to vector<1x288xf32>
    %2 = arith.mulf %1, %0 : vector<1x288xf32>
    %3 = math.tanh %2 : vector<1x288xf32>
    %cst_1 = arith.constant 5.000000e-01 : f32
    %4 = vector.broadcast %cst_1 : f32 to vector<1x288xf32>
    %5 = arith.mulf %4, %3 : vector<1x288xf32>
    %cst_2 = arith.constant 5.000000e-01 : f32
    %6 = vector.broadcast %cst_2 : f32 to vector<1x288xf32>
    %7 = arith.addf %5, %6 : vector<1x288xf32>
    %c0_3 = arith.constant 0 : index
    %c0_4 = arith.constant 0 : index
    %8 = vector.load %arg1[%c0_3, %c0_4] : memref<1x288xf32, #tpu.memory_space<vmem>>, vector<1x288xf32>
    tpu.vector_store %arg1[%c0_3, %c0_4], %7 {strides = array<i32>} : memref<1x288xf32, #tpu.memory_space<vmem>>, vector<1x288xf32>,
    return
  }
}

</mosaic_0001>

<llo_original>
// kernel: tpu_custom_call.1
$region0: #{tpu_custom_call.1}
  #allocation0 [shape = 'u32[]', space=smem, size = 0x4, offset = 0x4, fixed_abs, tag = 'smem constant byte address 0x4 - core index']
  #allocation1 [shape = 'u32[144,128]{1,0:T(1,128)}', space=vmem, size = 0x12000, scoped, tag = 'internal scratch']
  %s0 = inlined_call_operand.hbm [shape: f32[1,288], index: 0, kind: input, shape index: {}, may-alias: {0,1}]
  %s1 = inlined_call_operand.hbm [shape: f32[1,288], index: 1, kind: output, shape index: {}, may-alias: {0,1}]
  %s2 = sld [smem:[#allocation0]]
  $region18: #{tpu_custom_call.1} parent=0
    _
  %s4 = ssub.s32 1, %s2
  %s5 = scalar_select 0, %s4, %s2
  $region1: #{tpu_custom_call.1} parent=0
    #allocation2 [shape = 'u8[1536]{0}', space=vmem, size = 0x800, scoped, tag = 'input window, operand 0, single buffered']
    #allocation3 [shape = 's32[1]{0}', space=sflag, size = 0x4, scoped, tag = 'scoped memory for tpu_custom_call.1']
    #allocation4 [shape = 's32[1]{0}', space=sflag, size = 0x4, scoped, tag = 'scoped memory for tpu_custom_call.1']
    #allocation5 [shape = 'u8[1536]{0}', space=vmem, size = 0x800, scoped, tag = 'output window, operand 0, single buffered']
    %6 = vsyncpa [#allocation3], 0
    %7 = vsyncpa [#allocation4], 0
    // Predicated region
    $region2: #{tpu_custom_call.1} parent=1 // pred_check
      _
    $region3: #{tpu_custom_call.1} parent=1 // pred_check_branch
      %9 = sbr.rel (0) target = $region5
    $region4: #{tpu_custom_call.1} parent=1 // pred_region
      %s11 = ssub.s32 48, 48
      %12 = vsyncadd [#allocation3], %s11
      %s14 = sshll.u32 [#allocation2], 4
      %s15 = int_to_ptr.vmem [resolvable:$true] %s14
      %17 = dma.hbm_to_vmem [thread:$0]  %s0, 48, %s15, [#allocation3]
    $region5: #{tpu_custom_call.1} parent=1 // pred_fallthru
      _
    // Predicated region
    $region6: #{tpu_custom_call.1} parent=1 // pred_check
      _
    $region7: #{tpu_custom_call.1} parent=1 // pred_check_branch
      %19 = sbr.rel (0) target = $region9
    $region8: #{tpu_custom_call.1} parent=1 // pred_region
      %20 = dma.done [#allocation3], 48
    $region9: #{tpu_custom_call.1} parent=1 // pred_fallthru
      _
    %v21 = vld [vmem:[#allocation2] sm:$0x7]
    %v22 = vmul.f32 %v21, 0.5
    %v23 = vtanh.pop %v22
    %v24 = vmul.f32 %v23, 0.5
    %v25 = vadd.f32 %v24, 0.5
    %v26 = vlaneseq
    %vm27 = vcmp.ge.s32.totalorder %v26, 0
    %vm28 = vcmp.lt.s32.totalorder %v26, 288
    %vm29 = vmand %vm27, %vm28
    %30 = vst.msk [vmem:[#allocation5] sm:$0x7] %vm29, %v25
    // Predicated region
    $region10: #{tpu_custom_call.1} parent=1 // pred_check
      _
    $region11: #{tpu_custom_call.1} parent=1 // pred_check_branch
      %32 = sbr.rel (0) target = $region13
    $region12: #{tpu_custom_call.1} parent=1 // pred_region
      %s34 = ssub.s32 48, 48
      %35 = vsyncadd [#allocation4], %s34
      %s37 = sshll.u32 [#allocation5], 4
      %s38 = int_to_ptr.vmem [resolvable:$true] %s37
      %40 = dma.vmem_to_hbm [thread:$0]  %s38, 48, %s1, [#allocation4]
    $region13: #{tpu_custom_call.1} parent=1 // pred_fallthru
      _
    // Predicated region
    $region14: #{tpu_custom_call.1} parent=1 // pred_check
      _
    $region15: #{tpu_custom_call.1} parent=1 // pred_check_branch
      %42 = sbr.rel (0) target = $region17
    $region16: #{tpu_custom_call.1} parent=1 // pred_region
      %43 = dma.done [#allocation4], 48
    $region17: #{tpu_custom_call.1} parent=1 // pred_fallthru
      _
    %44 = vsyncpa [#allocation3], 1
    %45 = vsyncpa [#allocation4], 1

</llo_original>
